<compile_context>
chip_gen: v7x
topology: tpu7x:2x2x1
jax: 0.10.0
libtpu: 0.0.40
codegen_flags: <defaults>
</compile_context>

<pallas_src>
import functools

import jax
import jax.numpy as jnp
from jax.experimental import pallas as pl
from jax.experimental.pallas import tpu as pltpu


def actor_kernel(x_ref, w1_ref, b1_ref, w2_ref, b2_ref, out_ref):
    # x_ref:  (TB, OBS)   batch tile of flattened states
    # w1_ref: (OBS, H)    fc1 weight ([in, out] layout)
    # b1_ref: (1, H)      fc1 bias
    # w2_ref: (H, A)      fc2 weight
    # b2_ref: (1, A)      fc2 bias
    # out_ref:(TB, A)     per-row softmax probabilities
    x = x_ref[...]

    # fc1 + ReLU  (MXU matmul, f32 accumulate)
    h = jnp.dot(x, w1_ref[...], preferred_element_type=jnp.float32) + b1_ref[...]
    h = jnp.maximum(h, 0.0)

    # fc2
    logits = jnp.dot(h, w2_ref[...], preferred_element_type=jnp.float32) + b2_ref[...]

    # numerically-stable softmax over the action axis (exact normalization so
    # each row sums to 1 up to f32 rounding)
    m = jnp.max(logits, axis=-1, keepdims=True)
    e = jnp.exp(logits - m)
    denom = jnp.sum(e, axis=-1, keepdims=True)
    out_ref[...] = e / denom


def prepare_params(w1, b1, w2, b2):
    """One-time parameter prep: cast to f32 and reshape biases to 2-D rows.

    Keeps all per-call wrapper work out of the forward path.
    """
    hidden = w1.shape[1]
    actions = w2.shape[1]
    return (
        w1.astype(jnp.float32),
        b1.reshape(1, hidden).astype(jnp.float32),
        w2.astype(jnp.float32),
        b2.reshape(1, actions).astype(jnp.float32),
    )


@functools.partial(jax.jit, static_argnames=("block_b",))
def actor_forward_batch(states, params, *, block_b=128):
    """Batched forward: states [B, ...] -> softmax probs [B, A].

    Each row is flattened and run through relu(fc1) -> softmax(fc2, last axis),
    matching the per-state semantics of the PyTorch module.
    """
    w1, b1, w2, b2 = params
    obs = w1.shape[0]
    hidden = w1.shape[1]
    actions = w2.shape[1]

    b = states.shape[0]
    x = states.reshape(b, obs).astype(jnp.float32)

    tb = min(block_b, b)
    nb = pl.cdiv(b, tb)
    bp = nb * tb
    if bp != b:  # pad ragged final tile; sliced off below
        x = jnp.pad(x, ((0, bp - b), (0, 0)))

    out = pl.pallas_call(
        actor_kernel,
        out_shape=jax.ShapeDtypeStruct((bp, actions), jnp.float32),
        grid=(nb,),
        in_specs=[
            pl.BlockSpec((tb, obs), lambda i: (i, 0)),
            pl.BlockSpec((obs, hidden), lambda i: (0, 0)),
            pl.BlockSpec((1, hidden), lambda i: (0, 0)),
            pl.BlockSpec((hidden, actions), lambda i: (0, 0)),
            pl.BlockSpec((1, actions), lambda i: (0, 0)),
        ],
        out_specs=pl.BlockSpec((tb, actions), lambda i: (i, 0)),
        compiler_params=pltpu.CompilerParams(
            dimension_semantics=("parallel",),
        ),
    )(x, w1, b1, w2, b2)

    return out[:b]


def actor_forward(state, params):
    """Single-state forward matching the PyTorch module exactly:
    flatten(state) -> relu(fc1) -> softmax(fc2, dim=0) -> [A]."""
    actions = params[2].shape[1]
    probs = actor_forward_batch(state.reshape(1, -1), params, block_b=1)
    return probs.reshape(actions)


def init_params(key, observation_space, hidden, action_space):
    """Deterministic synthetic params with nn.Linear-style uniform init."""
    k1, k2, k3, k4 = jax.random.split(key, 4)
    bound1 = 1.0 / jnp.sqrt(observation_space)
    bound2 = 1.0 / jnp.sqrt(hidden)
    # stored as [in, out] for row-vector matmul (torch stores [out, in])
    w1 = jax.random.uniform(k1, (observation_space, hidden), jnp.float32,
                            -bound1, bound1)
    b1 = jax.random.uniform(k2, (hidden,), jnp.float32, -bound1, bound1)
    w2 = jax.random.uniform(k3, (hidden, action_space), jnp.float32,
                            -bound2, bound2)
    b2 = jax.random.uniform(k4, (action_space,), jnp.float32, -bound2, bound2)
    return w1, b1, w2, b2


if __name__ == "__main__":
    key = jax.random.PRNGKey(0)
    k_state, k_batch, k_params = jax.random.split(key, 3)

    OBSERVATION_SPACE = 16   # e.g. a 4x4 observation grid, flattened
    HIDDEN = 32
    ACTION_SPACE = 8
    BATCH = 256              # batched path: 2 tiles of 128 rows, parallel grid

    w1, b1, w2, b2 = init_params(k_params, OBSERVATION_SPACE, HIDDEN, ACTION_SPACE)
    params = prepare_params(w1, b1, w2, b2)   # one-time cast/reshape hoist

    # ---- single-state path (exact PyTorch module semantics) ----
    state = jax.random.normal(k_state, (4, 4), jnp.float32)
    probs = actor_forward(state, params)
    jax.block_until_ready(probs)

    x = state.reshape(-1)
    ref = jax.nn.softmax(jnp.maximum(x @ w1 + b1, 0.0) @ w2 + b2, axis=0)
    assert probs.shape == (ACTION_SPACE,)
    assert jnp.allclose(probs, ref, atol=1e-4), (probs, ref)
    assert jnp.allclose(jnp.sum(probs), 1.0, atol=1e-4)

    # ---- batched path (many states per pallas_call) ----
    states = jax.random.normal(k_batch, (BATCH, 4, 4), jnp.float32)
    probs_b = actor_forward_batch(states, params, block_b=128)
    jax.block_until_ready(probs_b)

    xb = states.reshape(BATCH, -1)
    ref_b = jax.nn.softmax(jnp.maximum(xb @ w1 + b1, 0.0) @ w2 + b2, axis=-1)
    assert probs_b.shape == (BATCH, ACTION_SPACE)
    assert jnp.allclose(probs_b, ref_b, atol=1e-4)
    assert jnp.allclose(jnp.sum(probs_b, axis=-1), 1.0, atol=1e-4)

    print("KERNEL_OK")
</pallas_src>

<mosaic_0001>
module attributes {stable_mosaic.version = 11 : i64} {
  func.func @actor_kernel(%arg0: i32, %arg1: memref<1x16xf32, #tpu.memory_space<vmem>>, %arg2: memref<16x32xf32, #tpu.memory_space<vmem>>, %arg3: memref<1x32xf32, #tpu.memory_space<vmem>>, %arg4: memref<32x8xf32, #tpu.memory_space<vmem>>, %arg5: memref<1x8xf32, #tpu.memory_space<vmem>>, %arg6: memref<1x8xf32, #tpu.memory_space<vmem>>) attributes {dimension_semantics = [#tpu.dimension_semantics<parallel>], iteration_bounds = array<i64: 1>, scalar_prefetch = 0 : i64, scratch_operands = 0 : i64, tpu.core_type = #tpu.core_type<tc>, window_params = [{transform_indices = @transform_0, window_bounds = array<i64: 1, 16>}, {pipeline_mode = #tpu.pipeline_mode<synchronous>, transform_indices = @transform_1, window_bounds = array<i64: 16, 32>}, {pipeline_mode = #tpu.pipeline_mode<synchronous>, transform_indices = @transform_2, window_bounds = array<i64: 1, 32>}, {pipeline_mode = #tpu.pipeline_mode<synchronous>, transform_indices = @transform_3, window_bounds = array<i64: 32, 8>}, {pipeline_mode = #tpu.pipeline_mode<synchronous>, transform_indices = @transform_4, window_bounds = array<i64: 1, 8>}, {transform_indices = @transform_5, window_bounds = array<i64: 1, 8>}]} {
    %c0 = arith.constant 0 : index
    %c0_0 = arith.constant 0 : index
    %0 = vector.load %arg1[%c0, %c0_0] : memref<1x16xf32, #tpu.memory_space<vmem>>, vector<1x16xf32>
    %c0_1 = arith.constant 0 : index
    %c0_2 = arith.constant 0 : index
    %1 = vector.load %arg2[%c0_1, %c0_2] : memref<16x32xf32, #tpu.memory_space<vmem>>, vector<16x32xf32>
    %cst = arith.constant dense<0.000000e+00> : vector<1x32xf32>
    %2 = tpu.matmul %0, %1, %cst {dimension_numbers = #tpu.dot_dimension_numbers<[1], [0], [0], [1], [0, 0, 1, 1], [], []>} : vector<1x16xf32>, vector<16x32xf32>, vector<1x32xf32> -> vector<1x32xf32>
    %c0_3 = arith.constant 0 : index
    %c0_4 = arith.constant 0 : index
    %3 = vector.load %arg3[%c0_3, %c0_4] : memref<1x32xf32, #tpu.memory_space<vmem>>, vector<1x32xf32>
    %4 = arith.addf %2, %3 : vector<1x32xf32>
    %cst_5 = arith.constant 0.000000e+00 : f32
    %5 = vector.broadcast %cst_5 : f32 to vector<1x32xf32>
    %6 = arith.maximumf %4, %5 : vector<1x32xf32>
    %c0_6 = arith.constant 0 : index
    %c0_7 = arith.constant 0 : index
    %7 = vector.load %arg4[%c0_6, %c0_7] : memref<32x8xf32, #tpu.memory_space<vmem>>, vector<32x8xf32>
    %cst_8 = arith.constant dense<0.000000e+00> : vector<1x8xf32>
    %8 = tpu.matmul %6, %7, %cst_8 {dimension_numbers = #tpu.dot_dimension_numbers<[1], [0], [0], [1], [0, 0, 1, 1], [], []>} : vector<1x32xf32>, vector<32x8xf32>, vector<1x8xf32> -> vector<1x8xf32>
    %c0_9 = arith.constant 0 : index
    %c0_10 = arith.constant 0 : index
    %9 = vector.load %arg5[%c0_9, %c0_10] : memref<1x8xf32, #tpu.memory_space<vmem>>, vector<1x8xf32>
    %10 = arith.addf %8, %9 : vector<1x8xf32>
    %cst_11 = arith.constant dense<0xFF800000> : vector<1xf32>
    %11 = vector.multi_reduction <maximumf>, %10, %cst_11 [1] : vector<1x8xf32> to vector<1xf32>
    %12 = vector.shape_cast %11 : vector<1xf32> to vector<1x1xf32>
    %13 = vector.broadcast %12 : vector<1x1xf32> to vector<1x8xf32>
    %14 = arith.subf %10, %13 : vector<1x8xf32>
    %15 = math.exp %14 : vector<1x8xf32>
    %cst_12 = arith.constant dense<0.000000e+00> : vector<1xf32>
    %16 = vector.multi_reduction <add>, %15, %cst_12 [1] : vector<1x8xf32> to vector<1xf32>
    %17 = vector.shape_cast %16 : vector<1xf32> to vector<1x1xf32>
    %18 = vector.broadcast %17 : vector<1x1xf32> to vector<1x8xf32>
    %19 = arith.divf %15, %18 : vector<1x8xf32>
    %c0_13 = arith.constant 0 : index
    %c0_14 = arith.constant 0 : index
    %20 = vector.load %arg6[%c0_13, %c0_14] : memref<1x8xf32, #tpu.memory_space<vmem>>, vector<1x8xf32>
    tpu.vector_store %arg6[%c0_13, %c0_14], %19 {strides = array<i32>} : memref<1x8xf32, #tpu.memory_space<vmem>>, vector<1x8xf32>,
    return
  }
  func.func @transform_0(%arg0: i32) -> (i32, i32) {
    %c0_i32 = arith.constant 0 : i32
    %c0_i32_0 = arith.constant 0 : i32
    return %arg0, %c0_i32 : i32, i32
  }
  func.func @transform_1(%arg0: i32) -> (i32, i32) {
    %c0_i32 = arith.constant 0 : i32
    %c0_i32_0 = arith.constant 0 : i32
    %c0_i32_1 = arith.constant 0 : i32
    return %c0_i32, %c0_i32_0 : i32, i32
  }
  func.func @transform_2(%arg0: i32) -> (i32, i32) {
    %c0_i32 = arith.constant 0 : i32
    %c0_i32_0 = arith.constant 0 : i32
    %c0_i32_1 = arith.constant 0 : i32
    return %c0_i32, %c0_i32_0 : i32, i32
  }
  func.func @transform_3(%arg0: i32) -> (i32, i32) {
    %c0_i32 = arith.constant 0 : i32
    %c0_i32_0 = arith.constant 0 : i32
    %c0_i32_1 = arith.constant 0 : i32
    return %c0_i32, %c0_i32_0 : i32, i32
  }
  func.func @transform_4(%arg0: i32) -> (i32, i32) {
    %c0_i32 = arith.constant 0 : i32
    %c0_i32_0 = arith.constant 0 : i32
    %c0_i32_1 = arith.constant 0 : i32
    return %c0_i32, %c0_i32_0 : i32, i32
  }
  func.func @transform_5(%arg0: i32) -> (i32, i32) {
    %c0_i32 = arith.constant 0 : i32
    %c0_i32_0 = arith.constant 0 : i32
    return %arg0, %c0_i32 : i32, i32
  }
}

</mosaic_0001>

<llo_original>
// kernel: actor_forward_batch.1
$region0: #{actor_forward_batch.1}
  #allocation0 [shape = 'u32[]', space=smem, size = 0x4, offset = 0x4, fixed_abs, tag = 'smem constant byte address 0x4 - core index']
  #allocation1 [shape = 'u32[144,128]{1,0:T(1,128)}', space=vmem, size = 0x12000, scoped, tag = 'internal scratch']
  %s0 = inlined_call_operand.vmem [shape: f32[1,16], index: 0, kind: input, shape index: {}]
  %s1 = inlined_call_operand.vmem [shape: f32[16,32], index: 1, kind: input, shape index: {}]
  %s2 = inlined_call_operand.vmem [shape: f32[1,32], index: 2, kind: input, shape index: {}]
  %s3 = inlined_call_operand.vmem [shape: f32[32,8], index: 3, kind: input, shape index: {}]
  %s4 = inlined_call_operand.vmem [shape: f32[1,8], index: 4, kind: input, shape index: {}]
  %s5 = inlined_call_operand.hbm [shape: f32[1,8], index: 5, kind: output, shape index: {}]
  %s6 = sld [smem:[#allocation0]]
  $region30: #{actor_forward_batch.1} parent=0
    _
  %s8 = ssub.s32 1, %s6
  %s9 = scalar_select 0, %s8, %s6
  $region1: #{actor_forward_batch.1} parent=0
    #allocation2 [shape = 'u8[512]{0}', space=vmem, size = 0x400, scoped, tag = 'output window, operand 0, single buffered']
    #allocation3 [shape = 's32[1]{0}', space=sflag, size = 0x4, scoped, tag = 'scoped memory for actor_forward_batch.1']
    %10 = vsyncpa [#allocation3], 0
    // Predicated region
    $region2: #{actor_forward_batch.1} parent=1 // pred_check
      _
    $region3: #{actor_forward_batch.1} parent=1 // pred_check_branch
      %12 = sbr.rel (0) target = $region5
    $region4: #{actor_forward_batch.1} parent=1 // pred_region
      _
    $region5: #{actor_forward_batch.1} parent=1 // pred_fallthru
      _
    // Predicated region
    $region6: #{actor_forward_batch.1} parent=1 // pred_check
      _
    $region7: #{actor_forward_batch.1} parent=1 // pred_check_branch
      %14 = sbr.rel (0) target = $region9
    $region8: #{actor_forward_batch.1} parent=1 // pred_region
      _
    $region9: #{actor_forward_batch.1} parent=1 // pred_fallthru
      _
    // Predicated region
    $region10: #{actor_forward_batch.1} parent=1 // pred_check
      _
    $region11: #{actor_forward_batch.1} parent=1 // pred_check_branch
      %16 = sbr.rel (0) target = $region13
    $region12: #{actor_forward_batch.1} parent=1 // pred_region
      _
    $region13: #{actor_forward_batch.1} parent=1 // pred_fallthru
      _
    // Predicated region
    $region14: #{actor_forward_batch.1} parent=1 // pred_check
      _
    $region15: #{actor_forward_batch.1} parent=1 // pred_check_branch
      %18 = sbr.rel (0) target = $region17
    $region16: #{actor_forward_batch.1} parent=1 // pred_region
      _
    $region17: #{actor_forward_batch.1} parent=1 // pred_fallthru
      _
    // Predicated region
    $region18: #{actor_forward_batch.1} parent=1 // pred_check
      _
    $region19: #{actor_forward_batch.1} parent=1 // pred_check_branch
      %20 = sbr.rel (0) target = $region21
    $region20: #{actor_forward_batch.1} parent=1 // pred_region
      _
    $region21: #{actor_forward_batch.1} parent=1 // pred_fallthru
      _
    %v21 = vld [vmem:[%s0] sm:$0x1]
    %v22 = vld [vmem:[%s1] sm:$0xff]
    %v23 = vld [vmem:[%s1 + $0x8] sm:$0xff]
    %v24 = vld [vmem:[%s2] sm:$0x1]
    %vm25 = vcmask 130048
    %v27 = vsel %vm25, %v21, 0
    %29 = vmatprep.subr.mxu0 0.0
    %30 = vmatpush1.msra.mxu0 %v22
    %31 = vmatprep.subr.mxu0 0.0
    %32 = vmatpush1.msra.mxu0 %v23
    %33 = vmatprep.subr.mxu0 0.0
    %34 = vmatpush1.msra.mxu0 0.0
    %35 = vmatprep.subr.mxu0 0.0
    %36 = vmatpush1.msra.mxu0 0.0
    %37 = vmatprep.subr.mxu0 0.0
    %38 = vmatpush1.msra.mxu0 0.0
    %39 = vmatprep.subr.mxu0 0.0
    %40 = vmatpush1.msra.mxu0 0.0
    %41 = vmatprep.subr.mxu0 0.0
    %42 = vmatpush1.msra.mxu0 0.0
    %43 = vmatprep.subr.mxu0 0.0
    %44 = vmatpush1.msra.mxu0 0.0
    %45 = vmatprep.subr.mxu0 0.0
    %46 = vmatpush1.msra.mxu0 0.0
    %47 = vmatprep.subr.mxu0 0.0
    %48 = vmatpush1.msra.mxu0 0.0
    %49 = vmatprep.subr.mxu0 0.0
    %50 = vmatpush1.msra.mxu0 0.0
    %51 = vmatprep.subr.mxu0 0.0
    %52 = vmatpush1.msra.mxu0 0.0
    %53 = vmatprep.subr.mxu0 0.0
    %54 = vmatpush1.msra.mxu0 0.0
    %55 = vmatprep.subr.mxu0 0.0
    %56 = vmatpush1.msra.mxu0 0.0
    %57 = vmatprep.subr.mxu0 0.0
    %58 = vmatpush1.msra.mxu0 0.0
    %59 = vmatprep.subr.mxu0 0.0
    %60 = vmatpush1.msra.mxu0 0.0
    %61 = vmatprep.subr.mxu0 0.0
    %62 = vmatpush1.msra.mxu0 0.0
    %63 = vmatprep.subr.mxu0 0.0
    %64 = vmatpush1.msra.mxu0 0.0
    %65 = vmatprep.subr.mxu0 0.0
    %66 = vmatpush1.msra.mxu0 0.0
    %67 = vmatprep.subr.mxu0 0.0
    %68 = vmatpush1.msra.mxu0 0.0
    %69 = vmatprep.subr.mxu0 0.0
    %70 = vmatpush1.msra.mxu0 0.0
    %71 = vmatprep.subr.mxu0 0.0
    %72 = vmatpush1.msra.mxu0 0.0
    %73 = vmatprep.subr.mxu0 0.0
    %74 = vmatpush1.msra.mxu0 0.0
    %75 = vmatprep.subr.mxu0 0.0
    %76 = vmatpush1.msra.mxu0 0.0
    %77 = vmatprep.subr.mxu0 0.0
    %78 = vmatpush1.msra.mxu0 0.0
    %79 = vmatprep.subr.mxu0 0.0
    %80 = vmatpush1.msra.mxu0 0.0
    %81 = vmatprep.subr.mxu0 0.0
    %82 = vmatpush1.msra.mxu0 0.0
    %83 = vmatprep.subr.mxu0 0.0
    %84 = vmatpush1.msra.mxu0 0.0
    %85 = vmatprep.subr.mxu0 0.0
    %86 = vmatpush1.msra.mxu0 0.0
    %87 = vmatprep.subr.mxu0 0.0
    %88 = vmatpush1.msra.mxu0 0.0
    %89 = vmatprep.subr.mxu0 0.0
    %90 = vmatpush1.msra.mxu0 0.0
    %91 = vmatprep.subr.mxu0 0.0
    %92 = vmatpush1.msra.mxu0 0.0
    %93 = vmatprep.mubr.f32.mxu0 0.0
    %94 = vmatmul.mubr.f32.gmra.mrb[0].mxu0 %v27
    %v95 = vpop.f32.mrb[0].mxu0
    %v96 = vadd.f32 %v24, %v95
    %v97 = vpop.f32.mrb[0].mxu0
    %98 = vdwg.mxu0
    %v99 = vmax.f32 %v96, 0.0
    %v100 = vld [vmem:[%s3] sm:$0xff]
    %v101 = vld [vmem:[%s3 + $0x8] sm:$0xff]
    %v102 = vld [vmem:[%s3 + $0x10] sm:$0xff]
    %v103 = vld [vmem:[%s3 + $0x18] sm:$0xff]
    %v104 = vld [vmem:[%s4] sm:$0x1]
    %vm105 = vcmask 261120
    %v107 = vsel %vm105, %v99, 0
    %109 = vmatprep.subr.mxu0 0.0
    %110 = vmatpush1.msra.mxu0 %v100
    %111 = vmatprep.subr.mxu0 0.0
    %112 = vmatpush1.msra.mxu0 %v101
    %113 = vmatprep.subr.mxu0 0.0
    %114 = vmatpush1.msra.mxu0 %v102
    %115 = vmatprep.subr.mxu0 0.0
    %116 = vmatpush1.msra.mxu0 %v103
    %117 = vmatprep.subr.mxu0 0.0
    %118 = vmatpush1.msra.mxu0 0.0
    %119 = vmatprep.subr.mxu0 0.0
    %120 = vmatpush1.msra.mxu0 0.0
    %121 = vmatprep.subr.mxu0 0.0
    %122 = vmatpush1.msra.mxu0 0.0
    %123 = vmatprep.subr.mxu0 0.0
    %124 = vmatpush1.msra.mxu0 0.0
    %125 = vmatprep.subr.mxu0 0.0
    %126 = vmatpush1.msra.mxu0 0.0
    %127 = vmatprep.subr.mxu0 0.0
    %128 = vmatpush1.msra.mxu0 0.0
    %129 = vmatprep.subr.mxu0 0.0
    %130 = vmatpush1.msra.mxu0 0.0
    %131 = vmatprep.subr.mxu0 0.0
    %132 = vmatpush1.msra.mxu0 0.0
    %133 = vmatprep.subr.mxu0 0.0
    %134 = vmatpush1.msra.mxu0 0.0
    %135 = vmatprep.subr.mxu0 0.0
    %136 = vmatpush1.msra.mxu0 0.0
    %137 = vmatprep.subr.mxu0 0.0
    %138 = vmatpush1.msra.mxu0 0.0
    %139 = vmatprep.subr.mxu0 0.0
    %140 = vmatpush1.msra.mxu0 0.0
    %141 = vmatprep.subr.mxu0 0.0
    %142 = vmatpush1.msra.mxu0 0.0
    %143 = vmatprep.subr.mxu0 0.0
    %144 = vmatpush1.msra.mxu0 0.0
    %145 = vmatprep.subr.mxu0 0.0
    %146 = vmatpush1.msra.mxu0 0.0
    %147 = vmatprep.subr.mxu0 0.0
    %148 = vmatpush1.msra.mxu0 0.0
    %149 = vmatprep.subr.mxu0 0.0
    %150 = vmatpush1.msra.mxu0 0.0
    %151 = vmatprep.subr.mxu0 0.0
    %152 = vmatpush1.msra.mxu0 0.0
    %153 = vmatprep.subr.mxu0 0.0
    %154 = vmatpush1.msra.mxu0 0.0
    %155 = vmatprep.subr.mxu0 0.0
    %156 = vmatpush1.msra.mxu0 0.0
    %157 = vmatprep.subr.mxu0 0.0
    %158 = vmatpush1.msra.mxu0 0.0
    %159 = vmatprep.subr.mxu0 0.0
    %160 = vmatpush1.msra.mxu0 0.0
    %161 = vmatprep.subr.mxu0 0.0
    %162 = vmatpush1.msra.mxu0 0.0
    %163 = vmatprep.subr.mxu0 0.0
    %164 = vmatpush1.msra.mxu0 0.0
    %165 = vmatprep.subr.mxu0 0.0
    %166 = vmatpush1.msra.mxu0 0.0
    %167 = vmatprep.subr.mxu0 0.0
    %168 = vmatpush1.msra.mxu0 0.0
    %169 = vmatprep.subr.mxu0 0.0
    %170 = vmatpush1.msra.mxu0 0.0
    %171 = vmatprep.subr.mxu0 0.0
    %172 = vmatpush1.msra.mxu0 0.0
    %173 = vmatprep.mubr.f32.mxu0 0.0
    %174 = vmatmul.mubr.f32.gmra.mrb[0].mxu0 %v107
    %v175 = vpop.f32.mrb[0].mxu0
    %v176 = vadd.f32 %v104, %v175
    %v177 = vpop.f32.mrb[0].mxu0
    %178 = vdwg.mxu0
    %vm179 = vcmask 57344
    %v180 = vsel %vm179, %v176, -inf
    %181 = vmax.xlane.f32.xlu0 %v180
    %v182 = vpop.xlane.xlu0 %181
    %v183 = vsub.f32 %v176, %v182
    %v184 = vmul.f32 %v183, 1.442695
    %v185 = vpow.pop %v184
    %v186 = vsel %vm179, %v185, 0.0
    %187 = vadd.xlane.f32.xlu0 %v186
    %v188 = vpop.xlane.xlu0 %187
    %v189 = vrcp.pop %v188
    %v190 = vmul.f32 %v185, %v189
    %191 = vst.msk [vmem:[#allocation2] sm:$0x1] %vm179, %v190
    // Predicated region
    $region22: #{actor_forward_batch.1} parent=1 // pred_check
      _
    $region23: #{actor_forward_batch.1} parent=1 // pred_check_branch
      %193 = sbr.rel (0) target = $region25
    $region24: #{actor_forward_batch.1} parent=1 // pred_region
      %s195 = ssub.s32 16, 16
      %196 = vsyncadd [#allocation3], %s195
      %s198 = sshll.u32 [#allocation2], 4
      %s199 = int_to_ptr.vmem [resolvable:$true] %s198
      %201 = dma.vmem_to_hbm [thread:$0]  %s199, 16, %s5, [#allocation3]
    $region25: #{actor_forward_batch.1} parent=1 // pred_fallthru
      _
    // Predicated region
    $region26: #{actor_forward_batch.1} parent=1 // pred_check
      _
    $region27: #{actor_forward_batch.1} parent=1 // pred_check_branch
      %203 = sbr.rel (0) target = $region29
    $region28: #{actor_forward_batch.1} parent=1 // pred_region
      %204 = dma.done [#allocation3], 16
    $region29: #{actor_forward_batch.1} parent=1 // pred_fallthru
      _
    %205 = vsyncpa [#allocation3], 1

</llo_original>
